<compile_context>
chip_gen: v7x
topology: tpu7x:2x2x1
jax: 0.10.0
libtpu: 0.0.40
codegen_flags: <defaults>
</compile_context>

<pallas_src>
import jax
import jax.numpy as jnp
from jax.experimental import pallas as pl
from jax.experimental.pallas import tpu as pltpu


def fcnet_kernel(
    xT_ref,                                   # (num_inputs, Bt) f32
    w0_ref, b0_ref,                           # feats[0]: Linear(num_inputs, H)
    r1w1_ref, r1b1_ref, r1w2_ref, r1b2_ref,   # ResLayer 1
    r2w1_ref, r2b1_ref, r2w2_ref, r2b2_ref,   # ResLayer 2
    r3w1_ref, r3b1_ref, r3w2_ref, r3b2_ref,   # ResLayer 3
    r4w1_ref, r4b1_ref, r4w2_ref, r4b2_ref,   # ResLayer 4
    wc_ref,                                   # class_emb: Linear(H, C, bias=False)
    outT_ref,                                 # (C, Bt) f32
):
    def linear(w_ref, h, b_ref=None):
        # h: (in, Bt) f32 -> (out, Bt) f32.  bf16 MXU matmul, f32 accumulate.
        y = jnp.dot(w_ref[...], h.astype(jnp.bfloat16),
                    preferred_element_type=jnp.float32)
        if b_ref is not None:
            y = y + b_ref[...]            # (out, 1) broadcasts along lanes
        return y

    # Input projection + ReLU.
    h = jnp.maximum(linear(w0_ref, xT_ref[...], b0_ref), 0.0)

    def res_layer(h, w1, b1, w2, b2):
        y = jnp.maximum(linear(w1, h, b1), 0.0)
        # dropout (eval mode) == identity
        y = jnp.maximum(linear(w2, y, b2), 0.0)
        return h + y

    h = res_layer(h, r1w1_ref, r1b1_ref, r1w2_ref, r1b2_ref)
    h = res_layer(h, r2w1_ref, r2b1_ref, r2w2_ref, r2b2_ref)
    h = res_layer(h, r3w1_ref, r3b1_ref, r3w2_ref, r3b2_ref)
    h = res_layer(h, r4w1_ref, r4b1_ref, r4w2_ref, r4b2_ref)

    # class_emb (no bias).  Lane-dense (C, Bt) store.
    outT_ref[...] = linear(wc_ref, h).astype(outT_ref.dtype)


def fcnet_forward(x, params, *, batch_tile=512):
    """x: (B, num_inputs) float32.  params: PyTorch-layout weights (see init)."""
    B, num_inputs = x.shape
    H = params["w0"].shape[0]
    C = params["wc"].shape[0]

    # Batch sits on the lane dim inside the kernel -> keep tiles 128-aligned.
    batch_tile = max(128, (batch_tile // 128) * 128)
    n_tiles = -(-B // batch_tile)                 # cdiv
    if n_tiles == 1:
        # Small batch: single grid step sized to the lane-padded batch.
        batch_tile = -(-B // 128) * 128
    B_pad = n_tiles * batch_tile

    # Transpose once (batch -> lanes) and zero-pad the batch dim in the wrapper.
    xT = x.T
    if B_pad != B:
        xT = jnp.pad(xT, ((0, 0), (0, B_pad - B)))

    names = [
        "w0", "b0",
        "r1w1", "r1b1", "r1w2", "r1b2",
        "r2w1", "r2b1", "r2w2", "r2b2",
        "r3w1", "r3b1", "r3w2", "r3b2",
        "r4w1", "r4b1", "r4w2", "r4b2",
        "wc",
    ]
    # Cast matmul weights (not biases) to bf16 once, here in the wrapper.
    flat_params = [
        params[n].astype(jnp.bfloat16) if "w" in n else params[n] for n in names
    ]

    # x / out are tiled over the (padded) batch; weights are full-array,
    # VMEM-resident, and not part of the pipelined grid axis (single buffer).
    x_spec = pl.BlockSpec((num_inputs, batch_tile), lambda i: (0, i))
    out_spec = pl.BlockSpec((C, batch_tile), lambda i: (0, i))
    weight_specs = [
        pl.BlockSpec(memory_space=pltpu.MemorySpace.VMEM) for _ in flat_params
    ]

    outT = pl.pallas_call(
        fcnet_kernel,
        out_shape=jax.ShapeDtypeStruct((C, B_pad), jnp.float32),
        grid_spec=pltpu.PrefetchScalarGridSpec(
            num_scalar_prefetch=0,
            grid=(n_tiles,),
            in_specs=[x_spec] + weight_specs,
            out_specs=out_spec,
        ),
        compiler_params=pltpu.CompilerParams(
            dimension_semantics=("parallel",),    # v7x: 2 TCs split batch tiles
        ),
    )(xT, *flat_params)

    # Back to the caller's (B, C) layout; drop batch padding.
    return outT[:, :B].T


def init_fcnet_params(key, num_inputs, num_classes, dim_hidden):
    """PyTorch nn.Linear default init: U(-1/sqrt(fan_in), 1/sqrt(fan_in)).
    Weights stored in PyTorch layout (out_features, in_features); biases as
    (out_features, 1) columns (the kernel keeps the batch on the lane dim)."""
    def linear(key, fan_in, fan_out, bias=True):
        bound = 1.0 / jnp.sqrt(jnp.float32(fan_in))
        kw, kb = jax.random.split(key)
        w = jax.random.uniform(kw, (fan_out, fan_in), jnp.float32, -bound, bound)
        if not bias:
            return w, None
        b = jax.random.uniform(kb, (fan_out, 1), jnp.float32, -bound, bound)
        return w, b

    keys = jax.random.split(key, 10)
    params = {}
    params["w0"], params["b0"] = linear(keys[0], num_inputs, dim_hidden)
    for li in range(4):
        w1, b1 = linear(keys[1 + 2 * li], dim_hidden, dim_hidden)
        w2, b2 = linear(keys[2 + 2 * li], dim_hidden, dim_hidden)
        params[f"r{li+1}w1"], params[f"r{li+1}b1"] = w1, b1
        params[f"r{li+1}w2"], params[f"r{li+1}b2"] = w2, b2
    params["wc"], _ = linear(keys[9], dim_hidden, num_classes, bias=False)
    return params


def fcnet_reference(x, params):
    """Pure-JAX reference of the same forward pass (eval-mode dropout) with the
    same bf16-matmul / f32-accumulate numerics, in (B, features) layout."""
    def lin(a, w, b=None):
        y = jnp.dot(a.astype(jnp.bfloat16), w.T.astype(jnp.bfloat16),
                    preferred_element_type=jnp.float32)
        return y if b is None else y + b.reshape(1, -1)

    h = jnp.maximum(lin(x, params["w0"], params["b0"]), 0.0)
    for li in range(1, 5):
        y = jnp.maximum(lin(h, params[f"r{li}w1"], params[f"r{li}b1"]), 0.0)
        y = jnp.maximum(lin(y, params[f"r{li}w2"], params[f"r{li}b2"]), 0.0)
        h = h + y
    return lin(h, params["wc"])


if __name__ == "__main__":
    num_inputs, num_classes, dim_hidden = 4, 16, 32
    batch = 64

    key = jax.random.PRNGKey(0)
    kx, kp = jax.random.split(key)
    x = jax.random.normal(kx, (batch, num_inputs), jnp.float32)
    params = init_fcnet_params(kp, num_inputs, num_classes, dim_hidden)

    out = fcnet_forward(x, params)
    out = jax.block_until_ready(out)

    ref = fcnet_reference(x, params)
    assert out.shape == (batch, num_classes)
    max_err = float(jnp.max(jnp.abs(out - ref)))
    assert jnp.allclose(out, ref, atol=5e-3, rtol=5e-3), (
        f"mismatch vs reference: max abs err {max_err}"
    )

    print("KERNEL_OK")
</pallas_src>

<mosaic_0001>
module attributes {stable_mosaic.version = 11 : i64} {
  func.func @fcnet_kernel(%arg0: i32, %arg1: memref<4x128xf32, #tpu.memory_space<vmem>>, %arg2: memref<32x4xbf16, #tpu.memory_space<vmem>>, %arg3: memref<32x1xf32, #tpu.memory_space<vmem>>, %arg4: memref<32x32xbf16, #tpu.memory_space<vmem>>, %arg5: memref<32x1xf32, #tpu.memory_space<vmem>>, %arg6: memref<32x32xbf16, #tpu.memory_space<vmem>>, %arg7: memref<32x1xf32, #tpu.memory_space<vmem>>, %arg8: memref<32x32xbf16, #tpu.memory_space<vmem>>, %arg9: memref<32x1xf32, #tpu.memory_space<vmem>>, %arg10: memref<32x32xbf16, #tpu.memory_space<vmem>>, %arg11: memref<32x1xf32, #tpu.memory_space<vmem>>, %arg12: memref<32x32xbf16, #tpu.memory_space<vmem>>, %arg13: memref<32x1xf32, #tpu.memory_space<vmem>>, %arg14: memref<32x32xbf16, #tpu.memory_space<vmem>>, %arg15: memref<32x1xf32, #tpu.memory_space<vmem>>, %arg16: memref<32x32xbf16, #tpu.memory_space<vmem>>, %arg17: memref<32x1xf32, #tpu.memory_space<vmem>>, %arg18: memref<32x32xbf16, #tpu.memory_space<vmem>>, %arg19: memref<32x1xf32, #tpu.memory_space<vmem>>, %arg20: memref<16x32xbf16, #tpu.memory_space<vmem>>, %arg21: memref<16x128xf32, #tpu.memory_space<vmem>>) attributes {dimension_semantics = [#tpu.dimension_semantics<parallel>], iteration_bounds = array<i64: 1>, scalar_prefetch = 0 : i64, scratch_operands = 0 : i64, tpu.core_type = #tpu.core_type<tc>, window_params = [{transform_indices = @transform_0, window_bounds = array<i64: 4, 128>}, {pipeline_mode = #tpu.pipeline_mode<synchronous>, transform_indices = @transform_1, window_bounds = array<i64: 32, 4>}, {pipeline_mode = #tpu.pipeline_mode<synchronous>, transform_indices = @transform_2, window_bounds = array<i64: 32, 1>}, {pipeline_mode = #tpu.pipeline_mode<synchronous>, transform_indices = @transform_3, window_bounds = array<i64: 32, 32>}, {pipeline_mode = #tpu.pipeline_mode<synchronous>, transform_indices = @transform_4, window_bounds = array<i64: 32, 1>}, {pipeline_mode = #tpu.pipeline_mode<synchronous>, transform_indices = @transform_5, window_bounds = array<i64: 32, 32>}, {pipeline_mode = #tpu.pipeline_mode<synchronous>, transform_indices = @transform_6, window_bounds = array<i64: 32, 1>}, {pipeline_mode = #tpu.pipeline_mode<synchronous>, transform_indices = @transform_7, window_bounds = array<i64: 32, 32>}, {pipeline_mode = #tpu.pipeline_mode<synchronous>, transform_indices = @transform_8, window_bounds = array<i64: 32, 1>}, {pipeline_mode = #tpu.pipeline_mode<synchronous>, transform_indices = @transform_9, window_bounds = array<i64: 32, 32>}, {pipeline_mode = #tpu.pipeline_mode<synchronous>, transform_indices = @transform_10, window_bounds = array<i64: 32, 1>}, {pipeline_mode = #tpu.pipeline_mode<synchronous>, transform_indices = @transform_11, window_bounds = array<i64: 32, 32>}, {pipeline_mode = #tpu.pipeline_mode<synchronous>, transform_indices = @transform_12, window_bounds = array<i64: 32, 1>}, {pipeline_mode = #tpu.pipeline_mode<synchronous>, transform_indices = @transform_13, window_bounds = array<i64: 32, 32>}, {pipeline_mode = #tpu.pipeline_mode<synchronous>, transform_indices = @transform_14, window_bounds = array<i64: 32, 1>}, {pipeline_mode = #tpu.pipeline_mode<synchronous>, transform_indices = @transform_15, window_bounds = array<i64: 32, 32>}, {pipeline_mode = #tpu.pipeline_mode<synchronous>, transform_indices = @transform_16, window_bounds = array<i64: 32, 1>}, {pipeline_mode = #tpu.pipeline_mode<synchronous>, transform_indices = @transform_17, window_bounds = array<i64: 32, 32>}, {pipeline_mode = #tpu.pipeline_mode<synchronous>, transform_indices = @transform_18, window_bounds = array<i64: 32, 1>}, {pipeline_mode = #tpu.pipeline_mode<synchronous>, transform_indices = @transform_19, window_bounds = array<i64: 16, 32>}, {transform_indices = @transform_20, window_bounds = array<i64: 16, 128>}]} {
    %c0 = arith.constant 0 : index
    %c0_0 = arith.constant 0 : index
    %0 = vector.load %arg1[%c0, %c0_0] : memref<4x128xf32, #tpu.memory_space<vmem>>, vector<4x128xf32>
    %c0_1 = arith.constant 0 : index
    %c0_2 = arith.constant 0 : index
    %1 = vector.load %arg2[%c0_1, %c0_2] : memref<32x4xbf16, #tpu.memory_space<vmem>>, vector<32x4xbf16>
    %2 = arith.truncf %0 : vector<4x128xf32> to vector<4x128xbf16>
    %cst = arith.constant dense<0.000000e+00> : vector<32x128xf32>
    %3 = tpu.matmul %1, %2, %cst {dimension_numbers = #tpu.dot_dimension_numbers<[1], [0], [0], [1], [0, 0, 1, 1], [], []>} : vector<32x4xbf16>, vector<4x128xbf16>, vector<32x128xf32> -> vector<32x128xf32>
    %c0_3 = arith.constant 0 : index
    %c0_4 = arith.constant 0 : index
    %4 = vector.load %arg3[%c0_3, %c0_4] : memref<32x1xf32, #tpu.memory_space<vmem>>, vector<32x1xf32>
    %5 = vector.broadcast %4 : vector<32x1xf32> to vector<32x128xf32>
    %6 = arith.addf %3, %5 : vector<32x128xf32>
    %cst_5 = arith.constant 0.000000e+00 : f32
    %7 = vector.broadcast %cst_5 : f32 to vector<32x128xf32>
    %8 = arith.maximumf %6, %7 : vector<32x128xf32>
    %c0_6 = arith.constant 0 : index
    %c0_7 = arith.constant 0 : index
    %9 = vector.load %arg4[%c0_6, %c0_7] : memref<32x32xbf16, #tpu.memory_space<vmem>>, vector<32x32xbf16>
    %10 = arith.truncf %8 : vector<32x128xf32> to vector<32x128xbf16>
    %cst_8 = arith.constant dense<0.000000e+00> : vector<32x128xf32>
    %11 = tpu.matmul %9, %10, %cst_8 {dimension_numbers = #tpu.dot_dimension_numbers<[1], [0], [0], [1], [0, 0, 1, 1], [], []>} : vector<32x32xbf16>, vector<32x128xbf16>, vector<32x128xf32> -> vector<32x128xf32>
    %c0_9 = arith.constant 0 : index
    %c0_10 = arith.constant 0 : index
    %12 = vector.load %arg5[%c0_9, %c0_10] : memref<32x1xf32, #tpu.memory_space<vmem>>, vector<32x1xf32>
    %13 = vector.broadcast %12 : vector<32x1xf32> to vector<32x128xf32>
    %14 = arith.addf %11, %13 : vector<32x128xf32>
    %cst_11 = arith.constant 0.000000e+00 : f32
    %15 = vector.broadcast %cst_11 : f32 to vector<32x128xf32>
    %16 = arith.maximumf %14, %15 : vector<32x128xf32>
    %c0_12 = arith.constant 0 : index
    %c0_13 = arith.constant 0 : index
    %17 = vector.load %arg6[%c0_12, %c0_13] : memref<32x32xbf16, #tpu.memory_space<vmem>>, vector<32x32xbf16>
    %18 = arith.truncf %16 : vector<32x128xf32> to vector<32x128xbf16>
    %cst_14 = arith.constant dense<0.000000e+00> : vector<32x128xf32>
    %19 = tpu.matmul %17, %18, %cst_14 {dimension_numbers = #tpu.dot_dimension_numbers<[1], [0], [0], [1], [0, 0, 1, 1], [], []>} : vector<32x32xbf16>, vector<32x128xbf16>, vector<32x128xf32> -> vector<32x128xf32>
    %c0_15 = arith.constant 0 : index
    %c0_16 = arith.constant 0 : index
    %20 = vector.load %arg7[%c0_15, %c0_16] : memref<32x1xf32, #tpu.memory_space<vmem>>, vector<32x1xf32>
    %21 = vector.broadcast %20 : vector<32x1xf32> to vector<32x128xf32>
    %22 = arith.addf %19, %21 : vector<32x128xf32>
    %cst_17 = arith.constant 0.000000e+00 : f32
    %23 = vector.broadcast %cst_17 : f32 to vector<32x128xf32>
    %24 = arith.maximumf %22, %23 : vector<32x128xf32>
    %25 = arith.addf %8, %24 : vector<32x128xf32>
    %c0_18 = arith.constant 0 : index
    %c0_19 = arith.constant 0 : index
    %26 = vector.load %arg8[%c0_18, %c0_19] : memref<32x32xbf16, #tpu.memory_space<vmem>>, vector<32x32xbf16>
    %27 = arith.truncf %25 : vector<32x128xf32> to vector<32x128xbf16>
    %cst_20 = arith.constant dense<0.000000e+00> : vector<32x128xf32>
    %28 = tpu.matmul %26, %27, %cst_20 {dimension_numbers = #tpu.dot_dimension_numbers<[1], [0], [0], [1], [0, 0, 1, 1], [], []>} : vector<32x32xbf16>, vector<32x128xbf16>, vector<32x128xf32> -> vector<32x128xf32>
    %c0_21 = arith.constant 0 : index
    %c0_22 = arith.constant 0 : index
    %29 = vector.load %arg9[%c0_21, %c0_22] : memref<32x1xf32, #tpu.memory_space<vmem>>, vector<32x1xf32>
    %30 = vector.broadcast %29 : vector<32x1xf32> to vector<32x128xf32>
    %31 = arith.addf %28, %30 : vector<32x128xf32>
    %cst_23 = arith.constant 0.000000e+00 : f32
    %32 = vector.broadcast %cst_23 : f32 to vector<32x128xf32>
    %33 = arith.maximumf %31, %32 : vector<32x128xf32>
    %c0_24 = arith.constant 0 : index
    %c0_25 = arith.constant 0 : index
    %34 = vector.load %arg10[%c0_24, %c0_25] : memref<32x32xbf16, #tpu.memory_space<vmem>>, vector<32x32xbf16>
    %35 = arith.truncf %33 : vector<32x128xf32> to vector<32x128xbf16>
    %cst_26 = arith.constant dense<0.000000e+00> : vector<32x128xf32>
    %36 = tpu.matmul %34, %35, %cst_26 {dimension_numbers = #tpu.dot_dimension_numbers<[1], [0], [0], [1], [0, 0, 1, 1], [], []>} : vector<32x32xbf16>, vector<32x128xbf16>, vector<32x128xf32> -> vector<32x128xf32>
    %c0_27 = arith.constant 0 : index
    %c0_28 = arith.constant 0 : index
    %37 = vector.load %arg11[%c0_27, %c0_28] : memref<32x1xf32, #tpu.memory_space<vmem>>, vector<32x1xf32>
    %38 = vector.broadcast %37 : vector<32x1xf32> to vector<32x128xf32>
    %39 = arith.addf %36, %38 : vector<32x128xf32>
    %cst_29 = arith.constant 0.000000e+00 : f32
    %40 = vector.broadcast %cst_29 : f32 to vector<32x128xf32>
    %41 = arith.maximumf %39, %40 : vector<32x128xf32>
    %42 = arith.addf %25, %41 : vector<32x128xf32>
    %c0_30 = arith.constant 0 : index
    %c0_31 = arith.constant 0 : index
    %43 = vector.load %arg12[%c0_30, %c0_31] : memref<32x32xbf16, #tpu.memory_space<vmem>>, vector<32x32xbf16>
    %44 = arith.truncf %42 : vector<32x128xf32> to vector<32x128xbf16>
    %cst_32 = arith.constant dense<0.000000e+00> : vector<32x128xf32>
    %45 = tpu.matmul %43, %44, %cst_32 {dimension_numbers = #tpu.dot_dimension_numbers<[1], [0], [0], [1], [0, 0, 1, 1], [], []>} : vector<32x32xbf16>, vector<32x128xbf16>, vector<32x128xf32> -> vector<32x128xf32>
    %c0_33 = arith.constant 0 : index
    %c0_34 = arith.constant 0 : index
    %46 = vector.load %arg13[%c0_33, %c0_34] : memref<32x1xf32, #tpu.memory_space<vmem>>, vector<32x1xf32>
    %47 = vector.broadcast %46 : vector<32x1xf32> to vector<32x128xf32>
    %48 = arith.addf %45, %47 : vector<32x128xf32>
    %cst_35 = arith.constant 0.000000e+00 : f32
    %49 = vector.broadcast %cst_35 : f32 to vector<32x128xf32>
    %50 = arith.maximumf %48, %49 : vector<32x128xf32>
    %c0_36 = arith.constant 0 : index
    %c0_37 = arith.constant 0 : index
    %51 = vector.load %arg14[%c0_36, %c0_37] : memref<32x32xbf16, #tpu.memory_space<vmem>>, vector<32x32xbf16>
    %52 = arith.truncf %50 : vector<32x128xf32> to vector<32x128xbf16>
    %cst_38 = arith.constant dense<0.000000e+00> : vector<32x128xf32>
    %53 = tpu.matmul %51, %52, %cst_38 {dimension_numbers = #tpu.dot_dimension_numbers<[1], [0], [0], [1], [0, 0, 1, 1], [], []>} : vector<32x32xbf16>, vector<32x128xbf16>, vector<32x128xf32> -> vector<32x128xf32>
    %c0_39 = arith.constant 0 : index
    %c0_40 = arith.constant 0 : index
    %54 = vector.load %arg15[%c0_39, %c0_40] : memref<32x1xf32, #tpu.memory_space<vmem>>, vector<32x1xf32>
    %55 = vector.broadcast %54 : vector<32x1xf32> to vector<32x128xf32>
    %56 = arith.addf %53, %55 : vector<32x128xf32>
    %cst_41 = arith.constant 0.000000e+00 : f32
    %57 = vector.broadcast %cst_41 : f32 to vector<32x128xf32>
    %58 = arith.maximumf %56, %57 : vector<32x128xf32>
    %59 = arith.addf %42, %58 : vector<32x128xf32>
    %c0_42 = arith.constant 0 : index
    %c0_43 = arith.constant 0 : index
    %60 = vector.load %arg16[%c0_42, %c0_43] : memref<32x32xbf16, #tpu.memory_space<vmem>>, vector<32x32xbf16>
    %61 = arith.truncf %59 : vector<32x128xf32> to vector<32x128xbf16>
    %cst_44 = arith.constant dense<0.000000e+00> : vector<32x128xf32>
    %62 = tpu.matmul %60, %61, %cst_44 {dimension_numbers = #tpu.dot_dimension_numbers<[1], [0], [0], [1], [0, 0, 1, 1], [], []>} : vector<32x32xbf16>, vector<32x128xbf16>, vector<32x128xf32> -> vector<32x128xf32>
    %c0_45 = arith.constant 0 : index
    %c0_46 = arith.constant 0 : index
    %63 = vector.load %arg17[%c0_45, %c0_46] : memref<32x1xf32, #tpu.memory_space<vmem>>, vector<32x1xf32>
    %64 = vector.broadcast %63 : vector<32x1xf32> to vector<32x128xf32>
    %65 = arith.addf %62, %64 : vector<32x128xf32>
    %cst_47 = arith.constant 0.000000e+00 : f32
    %66 = vector.broadcast %cst_47 : f32 to vector<32x128xf32>
    %67 = arith.maximumf %65, %66 : vector<32x128xf32>
    %c0_48 = arith.constant 0 : index
    %c0_49 = arith.constant 0 : index
    %68 = vector.load %arg18[%c0_48, %c0_49] : memref<32x32xbf16, #tpu.memory_space<vmem>>, vector<32x32xbf16>
    %69 = arith.truncf %67 : vector<32x128xf32> to vector<32x128xbf16>
    %cst_50 = arith.constant dense<0.000000e+00> : vector<32x128xf32>
    %70 = tpu.matmul %68, %69, %cst_50 {dimension_numbers = #tpu.dot_dimension_numbers<[1], [0], [0], [1], [0, 0, 1, 1], [], []>} : vector<32x32xbf16>, vector<32x128xbf16>, vector<32x128xf32> -> vector<32x128xf32>
    %c0_51 = arith.constant 0 : index
    %c0_52 = arith.constant 0 : index
    %71 = vector.load %arg19[%c0_51, %c0_52] : memref<32x1xf32, #tpu.memory_space<vmem>>, vector<32x1xf32>
    %72 = vector.broadcast %71 : vector<32x1xf32> to vector<32x128xf32>
    %73 = arith.addf %70, %72 : vector<32x128xf32>
    %cst_53 = arith.constant 0.000000e+00 : f32
    %74 = vector.broadcast %cst_53 : f32 to vector<32x128xf32>
    %75 = arith.maximumf %73, %74 : vector<32x128xf32>
    %76 = arith.addf %59, %75 : vector<32x128xf32>
    %c0_54 = arith.constant 0 : index
    %c0_55 = arith.constant 0 : index
    %77 = vector.load %arg20[%c0_54, %c0_55] : memref<16x32xbf16, #tpu.memory_space<vmem>>, vector<16x32xbf16>
    %78 = arith.truncf %76 : vector<32x128xf32> to vector<32x128xbf16>
    %cst_56 = arith.constant dense<0.000000e+00> : vector<16x128xf32>
    %79 = tpu.matmul %77, %78, %cst_56 {dimension_numbers = #tpu.dot_dimension_numbers<[1], [0], [0], [1], [0, 0, 1, 1], [], []>} : vector<16x32xbf16>, vector<32x128xbf16>, vector<16x128xf32> -> vector<16x128xf32>
    %c0_57 = arith.constant 0 : index
    %c0_58 = arith.constant 0 : index
    %80 = vector.load %arg21[%c0_57, %c0_58] : memref<16x128xf32, #tpu.memory_space<vmem>>, vector<16x128xf32>
    tpu.vector_store %arg21[%c0_57, %c0_58], %79 {strides = array<i32>} : memref<16x128xf32, #tpu.memory_space<vmem>>, vector<16x128xf32>,
    return
  }
  func.func @transform_0(%arg0: i32) -> (i32, i32) {
    %c0_i32 = arith.constant 0 : i32
    %c0_i32_0 = arith.constant 0 : i32
    return %c0_i32, %arg0 : i32, i32
  }
  func.func @transform_1(%arg0: i32) -> (i32, i32) {
    %c0_i32 = arith.constant 0 : i32
    %c0_i32_0 = arith.constant 0 : i32
    %c0_i32_1 = arith.constant 0 : i32
    return %c0_i32, %c0_i32_0 : i32, i32
  }
  func.func @transform_2(%arg0: i32) -> (i32, i32) {
    %c0_i32 = arith.constant 0 : i32
    %c0_i32_0 = arith.constant 0 : i32
    %c0_i32_1 = arith.constant 0 : i32
    return %c0_i32, %c0_i32_0 : i32, i32
  }
  func.func @transform_3(%arg0: i32) -> (i32, i32) {
    %c0_i32 = arith.constant 0 : i32
    %c0_i32_0 = arith.constant 0 : i32
    %c0_i32_1 = arith.constant 0 : i32
    return %c0_i32, %c0_i32_0 : i32, i32
  }
  func.func @transform_4(%arg0: i32) -> (i32, i32) {
    %c0_i32 = arith.constant 0 : i32
    %c0_i32_0 = arith.constant 0 : i32
    %c0_i32_1 = arith.constant 0 : i32
    return %c0_i32, %c0_i32_0 : i32, i32
  }
  func.func @transform_5(%arg0: i32) -> (i32, i32) {
    %c0_i32 = arith.constant 0 : i32
    %c0_i32_0 = arith.constant 0 : i32
    %c0_i32_1 = arith.constant 0 : i32
    return %c0_i32, %c0_i32_0 : i32, i32
  }
  func.func @transform_6(%arg0: i32) -> (i32, i32) {
    %c0_i32 = arith.constant 0 : i32
    %c0_i32_0 = arith.constant 0 : i32
    %c0_i32_1 = arith.constant 0 : i32
    return %c0_i32, %c0_i32_0 : i32, i32
  }
  func.func @transform_7(%arg0: i32) -> (i32, i32) {
    %c0_i32 = arith.constant 0 : i32
    %c0_i32_0 = arith.constant 0 : i32
    %c0_i32_1 = arith.constant 0 : i32
    return %c0_i32, %c0_i32_0 : i32, i32
  }
  func.func @transform_8(%arg0: i32) -> (i32, i32) {
    %c0_i32 = arith.constant 0 : i32
    %c0_i32_0 = arith.constant 0 : i32
    %c0_i32_1 = arith.constant 0 : i32
    return %c0_i32, %c0_i32_0 : i32, i32
  }
  func.func @transform_9(%arg0: i32) -> (i32, i32) {
    %c0_i32 = arith.constant 0 : i32
    %c0_i32_0 = arith.constant 0 : i32
    %c0_i32_1 = arith.constant 0 : i32
    return %c0_i32, %c0_i32_0 : i32, i32
  }
  func.func @transform_10(%arg0: i32) -> (i32, i32) {
    %c0_i32 = arith.constant 0 : i32
    %c0_i32_0 = arith.constant 0 : i32
    %c0_i32_1 = arith.constant 0 : i32
    return %c0_i32, %c0_i32_0 : i32, i32
  }
  func.func @transform_11(%arg0: i32) -> (i32, i32) {
    %c0_i32 = arith.constant 0 : i32
    %c0_i32_0 = arith.constant 0 : i32
    %c0_i32_1 = arith.constant 0 : i32
    return %c0_i32, %c0_i32_0 : i32, i32
  }
  func.func @transform_12(%arg0: i32) -> (i32, i32) {
    %c0_i32 = arith.constant 0 : i32
    %c0_i32_0 = arith.constant 0 : i32
    %c0_i32_1 = arith.constant 0 : i32
    return %c0_i32, %c0_i32_0 : i32, i32
  }
  func.func @transform_13(%arg0: i32) -> (i32, i32) {
    %c0_i32 = arith.constant 0 : i32
    %c0_i32_0 = arith.constant 0 : i32
    %c0_i32_1 = arith.constant 0 : i32
    return %c0_i32, %c0_i32_0 : i32, i32
  }
  func.func @transform_14(%arg0: i32) -> (i32, i32) {
    %c0_i32 = arith.constant 0 : i32
    %c0_i32_0 = arith.constant 0 : i32
    %c0_i32_1 = arith.constant 0 : i32
    return %c0_i32, %c0_i32_0 : i32, i32
  }
  func.func @transform_15(%arg0: i32) -> (i32, i32) {
    %c0_i32 = arith.constant 0 : i32
    %c0_i32_0 = arith.constant 0 : i32
    %c0_i32_1 = arith.constant 0 : i32
    return %c0_i32, %c0_i32_0 : i32, i32
  }
  func.func @transform_16(%arg0: i32) -> (i32, i32) {
    %c0_i32 = arith.constant 0 : i32
    %c0_i32_0 = arith.constant 0 : i32
    %c0_i32_1 = arith.constant 0 : i32
    return %c0_i32, %c0_i32_0 : i32, i32
  }
  func.func @transform_17(%arg0: i32) -> (i32, i32) {
    %c0_i32 = arith.constant 0 : i32
    %c0_i32_0 = arith.constant 0 : i32
    %c0_i32_1 = arith.constant 0 : i32
    return %c0_i32, %c0_i32_0 : i32, i32
  }
  func.func @transform_18(%arg0: i32) -> (i32, i32) {
    %c0_i32 = arith.constant 0 : i32
    %c0_i32_0 = arith.constant 0 : i32
    %c0_i32_1 = arith.constant 0 : i32
    return %c0_i32, %c0_i32_0 : i32, i32
  }
  func.func @transform_19(%arg0: i32) -> (i32, i32) {
    %c0_i32 = arith.constant 0 : i32
    %c0_i32_0 = arith.constant 0 : i32
    %c0_i32_1 = arith.constant 0 : i32
    return %c0_i32, %c0_i32_0 : i32, i32
  }
  func.func @transform_20(%arg0: i32) -> (i32, i32) {
    %c0_i32 = arith.constant 0 : i32
    %c0_i32_0 = arith.constant 0 : i32
    return %c0_i32, %arg0 : i32, i32
  }
}

</mosaic_0001>

<llo_original>
// kernel: tpu_custom_call.1
$region0: #{tpu_custom_call.1}
  #allocation0 [shape = 'u32[]', space=smem, size = 0x4, offset = 0x4, fixed_abs, tag = 'smem constant byte address 0x4 - core index']
  #allocation1 [shape = 'u32[144,128]{1,0:T(1,128)}', space=vmem, size = 0x12000, scoped, tag = 'internal scratch']
  %s0 = inlined_call_operand.vmem [shape: f32[4,128], index: 0, kind: input, shape index: {}]
  %s1 = inlined_call_operand.vmem [shape: bf16[32,4], index: 1, kind: input, shape index: {}]
  %s2 = inlined_call_operand.vmem [shape: f32[32,1], index: 2, kind: input, shape index: {}]
  %s3 = inlined_call_operand.vmem [shape: bf16[32,32], index: 3, kind: input, shape index: {}]
  %s4 = inlined_call_operand.vmem [shape: f32[32,1], index: 4, kind: input, shape index: {}]
  %s5 = inlined_call_operand.vmem [shape: bf16[32,32], index: 5, kind: input, shape index: {}]
  %s6 = inlined_call_operand.vmem [shape: f32[32,1], index: 6, kind: input, shape index: {}]
  %s7 = inlined_call_operand.vmem [shape: bf16[32,32], index: 7, kind: input, shape index: {}]
  %s8 = inlined_call_operand.vmem [shape: f32[32,1], index: 8, kind: input, shape index: {}]
  %s9 = inlined_call_operand.vmem [shape: bf16[32,32], index: 9, kind: input, shape index: {}]
  %s10 = inlined_call_operand.vmem [shape: f32[32,1], index: 10, kind: input, shape index: {}]
  %s11 = inlined_call_operand.vmem [shape: bf16[32,32], index: 11, kind: input, shape index: {}]
  %s12 = inlined_call_operand.vmem [shape: f32[32,1], index: 12, kind: input, shape index: {}]
  %s13 = inlined_call_operand.vmem [shape: bf16[32,32], index: 13, kind: input, shape index: {}]
  %s14 = inlined_call_operand.vmem [shape: f32[32,1], index: 14, kind: input, shape index: {}]
  %s15 = inlined_call_operand.vmem [shape: bf16[32,32], index: 15, kind: input, shape index: {}]
  %s16 = inlined_call_operand.vmem [shape: f32[32,1], index: 16, kind: input, shape index: {}]
  %s17 = inlined_call_operand.vmem [shape: bf16[32,32], index: 17, kind: input, shape index: {}]
  %s18 = inlined_call_operand.vmem [shape: f32[32,1], index: 18, kind: input, shape index: {}]
  %s19 = inlined_call_operand.vmem [shape: bf16[16,32], index: 19, kind: input, shape index: {}]
  %s20 = inlined_call_operand.hbm [shape: f32[16,128], index: 20, kind: output, shape index: {}]
  %s21 = sld [smem:[#allocation0]]
  $region90: #{tpu_custom_call.1} parent=0
    _
  %s23 = ssub.s32 1, %s21
  %s24 = scalar_select 0, %s23, %s21
  $region1: #{tpu_custom_call.1} parent=0
    #allocation2 [shape = 'u8[8192]{0}', space=vmem, size = 0x2000, scoped, tag = 'output window, operand 0, single buffered']
    #allocation3 [shape = 's32[1]{0}', space=sflag, size = 0x4, scoped, tag = 'scoped memory for tpu_custom_call.1']
    %25 = vsyncpa [#allocation3], 0
    // Predicated region
    $region2: #{tpu_custom_call.1} parent=1 // pred_check
      _
    $region3: #{tpu_custom_call.1} parent=1 // pred_check_branch
      %27 = sbr.rel (0) target = $region5
    $region4: #{tpu_custom_call.1} parent=1 // pred_region
      _
    $region5: #{tpu_custom_call.1} parent=1 // pred_fallthru
      _
    // Predicated region
    $region6: #{tpu_custom_call.1} parent=1 // pred_check
      _
    $region7: #{tpu_custom_call.1} parent=1 // pred_check_branch
      %29 = sbr.rel (0) target = $region9
    $region8: #{tpu_custom_call.1} parent=1 // pred_region
      _
    $region9: #{tpu_custom_call.1} parent=1 // pred_fallthru
      _
    // Predicated region
    $region10: #{tpu_custom_call.1} parent=1 // pred_check
      _
    $region11: #{tpu_custom_call.1} parent=1 // pred_check_branch
      %31 = sbr.rel (0) target = $region13
    $region12: #{tpu_custom_call.1} parent=1 // pred_region
      _
    $region13: #{tpu_custom_call.1} parent=1 // pred_fallthru
      _
    // Predicated region
    $region14: #{tpu_custom_call.1} parent=1 // pred_check
      _
    $region15: #{tpu_custom_call.1} parent=1 // pred_check_branch
      %33 = sbr.rel (0) target = $region17
    $region16: #{tpu_custom_call.1} parent=1 // pred_region
      _
    $region17: #{tpu_custom_call.1} parent=1 // pred_fallthru
      _
    // Predicated region
    $region18: #{tpu_custom_call.1} parent=1 // pred_check
      _
    $region19: #{tpu_custom_call.1} parent=1 // pred_check_branch
      %35 = sbr.rel (0) target = $region21
    $region20: #{tpu_custom_call.1} parent=1 // pred_region
      _
    $region21: #{tpu_custom_call.1} parent=1 // pred_fallthru
      _
    // Predicated region
    $region22: #{tpu_custom_call.1} parent=1 // pred_check
      _
    $region23: #{tpu_custom_call.1} parent=1 // pred_check_branch
      %37 = sbr.rel (0) target = $region25
    $region24: #{tpu_custom_call.1} parent=1 // pred_region
      _
    $region25: #{tpu_custom_call.1} parent=1 // pred_fallthru
      _
    // Predicated region
    $region26: #{tpu_custom_call.1} parent=1 // pred_check
      _
    $region27: #{tpu_custom_call.1} parent=1 // pred_check_branch
      %39 = sbr.rel (0) target = $region29
    $region28: #{tpu_custom_call.1} parent=1 // pred_region
      _
    $region29: #{tpu_custom_call.1} parent=1 // pred_fallthru
      _
    // Predicated region
    $region30: #{tpu_custom_call.1} parent=1 // pred_check
      _
    $region31: #{tpu_custom_call.1} parent=1 // pred_check_branch
      %41 = sbr.rel (0) target = $region33
    $region32: #{tpu_custom_call.1} parent=1 // pred_region
      _
    $region33: #{tpu_custom_call.1} parent=1 // pred_fallthru
      _
    // Predicated region
    $region34: #{tpu_custom_call.1} parent=1 // pred_check
      _
    $region35: #{tpu_custom_call.1} parent=1 // pred_check_branch
      %43 = sbr.rel (0) target = $region37
    $region36: #{tpu_custom_call.1} parent=1 // pred_region
      _
    $region37: #{tpu_custom_call.1} parent=1 // pred_fallthru
      _
    // Predicated region
    $region38: #{tpu_custom_call.1} parent=1 // pred_check
      _
    $region39: #{tpu_custom_call.1} parent=1 // pred_check_branch
      %45 = sbr.rel (0) target = $region41
    $region40: #{tpu_custom_call.1} parent=1 // pred_region
      _
    $region41: #{tpu_custom_call.1} parent=1 // pred_fallthru
      _
    // Predicated region
    $region42: #{tpu_custom_call.1} parent=1 // pred_check
      _
    $region43: #{tpu_custom_call.1} parent=1 // pred_check_branch
      %47 = sbr.rel (0) target = $region45
    $region44: #{tpu_custom_call.1} parent=1 // pred_region
      _
    $region45: #{tpu_custom_call.1} parent=1 // pred_fallthru
      _
    // Predicated region
    $region46: #{tpu_custom_call.1} parent=1 // pred_check
      _
    $region47: #{tpu_custom_call.1} parent=1 // pred_check_branch
      %49 = sbr.rel (0) target = $region49
    $region48: #{tpu_custom_call.1} parent=1 // pred_region
      _
    $region49: #{tpu_custom_call.1} parent=1 // pred_fallthru
      _
    // Predicated region
    $region50: #{tpu_custom_call.1} parent=1 // pred_check
      _
    $region51: #{tpu_custom_call.1} parent=1 // pred_check_branch
      %51 = sbr.rel (0) target = $region53
    $region52: #{tpu_custom_call.1} parent=1 // pred_region
      _
    $region53: #{tpu_custom_call.1} parent=1 // pred_fallthru
      _
    // Predicated region
    $region54: #{tpu_custom_call.1} parent=1 // pred_check
      _
    $region55: #{tpu_custom_call.1} parent=1 // pred_check_branch
      %53 = sbr.rel (0) target = $region57
    $region56: #{tpu_custom_call.1} parent=1 // pred_region
      _
    $region57: #{tpu_custom_call.1} parent=1 // pred_fallthru
      _
    // Predicated region
    $region58: #{tpu_custom_call.1} parent=1 // pred_check
      _
    $region59: #{tpu_custom_call.1} parent=1 // pred_check_branch
      %55 = sbr.rel (0) target = $region61
    $region60: #{tpu_custom_call.1} parent=1 // pred_region
      _
    $region61: #{tpu_custom_call.1} parent=1 // pred_fallthru
      _
    // Predicated region
    $region62: #{tpu_custom_call.1} parent=1 // pred_check
      _
    $region63: #{tpu_custom_call.1} parent=1 // pred_check_branch
      %57 = sbr.rel (0) target = $region65
    $region64: #{tpu_custom_call.1} parent=1 // pred_region
      _
    $region65: #{tpu_custom_call.1} parent=1 // pred_fallthru
      _
    // Predicated region
    $region66: #{tpu_custom_call.1} parent=1 // pred_check
      _
    $region67: #{tpu_custom_call.1} parent=1 // pred_check_branch
      %59 = sbr.rel (0) target = $region69
    $region68: #{tpu_custom_call.1} parent=1 // pred_region
      _
    $region69: #{tpu_custom_call.1} parent=1 // pred_fallthru
      _
    // Predicated region
    $region70: #{tpu_custom_call.1} parent=1 // pred_check
      _
    $region71: #{tpu_custom_call.1} parent=1 // pred_check_branch
      %61 = sbr.rel (0) target = $region73
    $region72: #{tpu_custom_call.1} parent=1 // pred_region
      _
    $region73: #{tpu_custom_call.1} parent=1 // pred_fallthru
      _
    // Predicated region
    $region74: #{tpu_custom_call.1} parent=1 // pred_check
      _
    $region75: #{tpu_custom_call.1} parent=1 // pred_check_branch
      %63 = sbr.rel (0) target = $region77
    $region76: #{tpu_custom_call.1} parent=1 // pred_region
      _
    $region77: #{tpu_custom_call.1} parent=1 // pred_fallthru
      _
    // Predicated region
    $region78: #{tpu_custom_call.1} parent=1 // pred_check
      _
    $region79: #{tpu_custom_call.1} parent=1 // pred_check_branch
      %65 = sbr.rel (0) target = $region81
    $region80: #{tpu_custom_call.1} parent=1 // pred_region
      _
    $region81: #{tpu_custom_call.1} parent=1 // pred_fallthru
      _
    %v67 = vld [vmem:[%s0] sm:$0xf]
    %v68 = vld [vmem:[%s1] sm:$0xf]
    %v69 = vld [vmem:[%s1 + $0x4] sm:$0xf]
    %v70 = vld [vmem:[%s1 + $0x8] sm:$0xf]
    %v71 = vld [vmem:[%s1 + $0xc] sm:$0xf]
    %v72 = vpack.c.bf16 %v67, %v67
    %v73 = vld [vmem:[%s2] sm:$0xff]
    %v74 = vld [vmem:[%s2 + $0x8] sm:$0xff]
    %v75 = vld [vmem:[%s2 + $0x10] sm:$0xff]
    %v76 = vld [vmem:[%s2 + $0x18] sm:$0xff]
    %78 = vset.pattern.permute.xlu0 0
    %79 = vperm.xlu0 %78, %v73
    %v80 = vpop.permute.xlu0 %79
    %83 = vset.pattern.permute.xlu0 0
    %84 = vperm.xlu0 %83, %v74
    %v85 = vpop.permute.xlu0 %84
    %88 = vset.pattern.permute.xlu0 0
    %89 = vperm.xlu0 %88, %v75
    %v90 = vpop.permute.xlu0 %89
    %93 = vset.pattern.permute.xlu0 0
    %94 = vperm.xlu0 %93, %v76
    %v95 = vpop.permute.xlu0 %94
    %v101 = vunpack.c.l.b16 %v68
    %v102 = vunpack.c.l.b16 %v69
    %v103 = vunpack.c.l.b16 %v70
    %v104 = vunpack.c.l.b16 %v71
    %v105 = vpack.c.b16 %v102, %v101
    %v106 = vpack.c.b16 %v104, %v103
    %vm107 = vcmask 31744
    %v109 = vsel %vm107, %v105, 0
    %v112 = vsel %vm107, %v106, 0
    %vm114 = vcmask 1041408
    %v116 = vsel %vm114, %v72, 0
    %118 = vmatprep.subr.bf16.mxu0 0
    %119 = vmatpush1.bf16.msra.mxu0 %v116
    %120 = vmatprep.subr.bf16.mxu0 0
    %121 = vmatpush1.bf16.msra.mxu0 0
    %122 = vmatprep.subr.bf16.mxu0 0
    %123 = vmatpush1.bf16.msra.mxu0 0
    %124 = vmatprep.subr.bf16.mxu0 0
    %125 = vmatpush1.bf16.msra.mxu0 0
    %126 = vmatprep.subr.bf16.mxu0 0
    %127 = vmatpush1.bf16.msra.mxu0 0
    %128 = vmatprep.subr.bf16.mxu0 0
    %129 = vmatpush1.bf16.msra.mxu0 0
    %130 = vmatprep.subr.bf16.mxu0 0
    %131 = vmatpush1.bf16.msra.mxu0 0
    %132 = vmatprep.subr.bf16.mxu0 0
    %133 = vmatpush1.bf16.msra.mxu0 0
    %134 = vmatprep.subr.bf16.mxu0 0
    %135 = vmatpush1.bf16.msra.mxu0 0
    %136 = vmatprep.subr.bf16.mxu0 0
    %137 = vmatpush1.bf16.msra.mxu0 0
    %138 = vmatprep.subr.bf16.mxu0 0
    %139 = vmatpush1.bf16.msra.mxu0 0
    %140 = vmatprep.subr.bf16.mxu0 0
    %141 = vmatpush1.bf16.msra.mxu0 0
    %142 = vmatprep.subr.bf16.mxu0 0
    %143 = vmatpush1.bf16.msra.mxu0 0
    %144 = vmatprep.subr.bf16.mxu0 0
    %145 = vmatpush1.bf16.msra.mxu0 0
    %146 = vmatprep.subr.bf16.mxu0 0
    %147 = vmatpush1.bf16.msra.mxu0 0
    %148 = vmatprep.subr.bf16.mxu0 0
    %149 = vmatpush1.bf16.msra.mxu0 0
    %150 = vmatprep.mubr.bf16.mxu0 0
    %151 = vmatmul.mubr.bf16.gmra.mrb[0].mxu0 %v109
    %v152 = vpop.f32.mrb[0].mxu0
    %v153 = vadd.f32 %v80, %v152
    %v154 = vpop.f32.mrb[0].mxu0
    %v155 = vpop.f32.mrb[0].mxu0
    %v156 = vadd.f32 %v85, %v155
    %v157 = vpop.f32.mrb[0].mxu0
    %158 = vmatprep.mubr.bf16.mxu0 0
    %159 = vmatmul.mubr.bf16.gmra.mrb[0].mxu0 %v112
    %v160 = vpop.f32.mrb[0].mxu0
    %v161 = vadd.f32 %v90, %v160
    %v162 = vpop.f32.mrb[0].mxu0
    %v163 = vpop.f32.mrb[0].mxu0
    %v164 = vadd.f32 %v95, %v163
    %v165 = vpop.f32.mrb[0].mxu0
    %166 = vdwg.mxu0
    %v167 = vmax.f32 %v153, 0.0
    %v168 = vmax.f32 %v156, 0.0
    %v169 = vmax.f32 %v161, 0.0
    %v170 = vmax.f32 %v164, 0.0
    %v171 = vld [vmem:[%s3] sm:$0xf]
    %v172 = vld [vmem:[%s3 + $0x4] sm:$0xf]
    %v173 = vld [vmem:[%s3 + $0x8] sm:$0xf]
    %v174 = vld [vmem:[%s3 + $0xc] sm:$0xf]
    %v175 = vpack.c.bf16 %v168, %v167
    %v176 = vpack.c.bf16 %v170, %v169
    %v177 = vld [vmem:[%s4] sm:$0xff]
    %v178 = vld [vmem:[%s4 + $0x8] sm:$0xff]
    %v179 = vld [vmem:[%s4 + $0x10] sm:$0xff]
    %v180 = vld [vmem:[%s4 + $0x18] sm:$0xff]
    %182 = vset.pattern.permute.xlu0 0
    %183 = vperm.xlu0 %182, %v177
    %v184 = vpop.permute.xlu0 %183
    %187 = vset.pattern.permute.xlu0 0
    %188 = vperm.xlu0 %187, %v178
    %v189 = vpop.permute.xlu0 %188
    %192 = vset.pattern.permute.xlu0 0
    %193 = vperm.xlu0 %192, %v179
    %v194 = vpop.permute.xlu0 %193
    %197 = vset.pattern.permute.xlu0 0
    %198 = vperm.xlu0 %197, %v180
    %v199 = vpop.permute.xlu0 %198
    %v205 = vunpack.c.l.b16 %v171
    %v206 = vunpack.c.l.b16 %v172
    %v207 = vunpack.c.l.b16 %v173
    %v208 = vunpack.c.l.b16 %v174
    %v209 = vpack.c.b16 %v206, %v205
    %v210 = vpack.c.b16 %v208, %v207
    %vm211 = vcmask 261120
    %v213 = vsel %vm211, %v209, 0
    %v216 = vsel %vm211, %v210, 0
    %218 = vmatprep.subr.bf16.mxu0 0
    %219 = vmatpush1.bf16.msra.mxu0 %v175
    %220 = vmatprep.subr.bf16.mxu0 0
    %221 = vmatpush1.bf16.msra.mxu0 %v176
    %222 = vmatprep.subr.bf16.mxu0 0
    %223 = vmatpush1.bf16.msra.mxu0 0
    %224 = vmatprep.subr.bf16.mxu0 0
    %225 = vmatpush1.bf16.msra.mxu0 0
    %226 = vmatprep.subr.bf16.mxu0 0
    %227 = vmatpush1.bf16.msra.mxu0 0
    %228 = vmatprep.subr.bf16.mxu0 0
    %229 = vmatpush1.bf16.msra.mxu0 0
    %230 = vmatprep.subr.bf16.mxu0 0
    %231 = vmatpush1.bf16.msra.mxu0 0
    %232 = vmatprep.subr.bf16.mxu0 0
    %233 = vmatpush1.bf16.msra.mxu0 0
    %234 = vmatprep.subr.bf16.mxu0 0
    %235 = vmatpush1.bf16.msra.mxu0 0
    %236 = vmatprep.subr.bf16.mxu0 0
    %237 = vmatpush1.bf16.msra.mxu0 0
    %238 = vmatprep.subr.bf16.mxu0 0
    %239 = vmatpush1.bf16.msra.mxu0 0
    %240 = vmatprep.subr.bf16.mxu0 0
    %241 = vmatpush1.bf16.msra.mxu0 0
    %242 = vmatprep.subr.bf16.mxu0 0
    %243 = vmatpush1.bf16.msra.mxu0 0
    %244 = vmatprep.subr.bf16.mxu0 0
    %245 = vmatpush1.bf16.msra.mxu0 0
    %246 = vmatprep.subr.bf16.mxu0 0
    %247 = vmatpush1.bf16.msra.mxu0 0
    %248 = vmatprep.subr.bf16.mxu0 0
    %249 = vmatpush1.bf16.msra.mxu0 0
    %250 = vmatprep.mubr.bf16.mxu0 0
    %251 = vmatmul.mubr.bf16.gmra.mrb[0].mxu0 %v213
    %v252 = vpop.f32.mrb[0].mxu0
    %v253 = vadd.f32 %v184, %v252
    %v254 = vpop.f32.mrb[0].mxu0
    %v255 = vpop.f32.mrb[0].mxu0
    %v256 = vadd.f32 %v189, %v255
    %v257 = vpop.f32.mrb[0].mxu0
    %258 = vmatprep.mubr.bf16.mxu0 0
    %259 = vmatmul.mubr.bf16.gmra.mrb[0].mxu0 %v216
    %v260 = vpop.f32.mrb[0].mxu0
    %v261 = vadd.f32 %v194, %v260
    %v262 = vpop.f32.mrb[0].mxu0
    %v263 = vpop.f32.mrb[0].mxu0
    %v264 = vadd.f32 %v199, %v263
    %v265 = vpop.f32.mrb[0].mxu0
    %266 = vdwg.mxu0
    %v267 = vmax.f32 %v253, 0.0
    %v268 = vmax.f32 %v256, 0.0
    %v269 = vmax.f32 %v261, 0.0
    %v270 = vmax.f32 %v264, 0.0
    %v271 = vld [vmem:[%s5] sm:$0xf]
    %v272 = vld [vmem:[%s5 + $0x4] sm:$0xf]
    %v273 = vld [vmem:[%s5 + $0x8] sm:$0xf]
    %v274 = vld [vmem:[%s5 + $0xc] sm:$0xf]
    %v275 = vpack.c.bf16 %v268, %v267
    %v276 = vpack.c.bf16 %v270, %v269
    %v277 = vld [vmem:[%s6] sm:$0xff]
    %v278 = vld [vmem:[%s6 + $0x8] sm:$0xff]
    %v279 = vld [vmem:[%s6 + $0x10] sm:$0xff]
    %v280 = vld [vmem:[%s6 + $0x18] sm:$0xff]
    %282 = vset.pattern.permute.xlu0 0
    %283 = vperm.xlu0 %282, %v277
    %v284 = vpop.permute.xlu0 %283
    %287 = vset.pattern.permute.xlu0 0
    %288 = vperm.xlu0 %287, %v278
    %v289 = vpop.permute.xlu0 %288
    %292 = vset.pattern.permute.xlu0 0
    %293 = vperm.xlu0 %292, %v279
    %v294 = vpop.permute.xlu0 %293
    %297 = vset.pattern.permute.xlu0 0
    %298 = vperm.xlu0 %297, %v280
    %v299 = vpop.permute.xlu0 %298
    %v305 = vunpack.c.l.b16 %v271
    %v306 = vunpack.c.l.b16 %v272
    %v307 = vunpack.c.l.b16 %v273
    %v308 = vunpack.c.l.b16 %v274
    %v309 = vpack.c.b16 %v306, %v305
    %v310 = vpack.c.b16 %v308, %v307
    %v312 = vsel %vm211, %v309, 0
    %v315 = vsel %vm211, %v310, 0
    %317 = vmatprep.subr.bf16.mxu0 0
    %318 = vmatpush1.bf16.msra.mxu0 %v275
    %319 = vmatprep.subr.bf16.mxu0 0
    %320 = vmatpush1.bf16.msra.mxu0 %v276
    %321 = vmatprep.subr.bf16.mxu0 0
    %322 = vmatpush1.bf16.msra.mxu0 0
    %323 = vmatprep.subr.bf16.mxu0 0
    %324 = vmatpush1.bf16.msra.mxu0 0
    %325 = vmatprep.subr.bf16.mxu0 0
    %326 = vmatpush1.bf16.msra.mxu0 0
    %327 = vmatprep.subr.bf16.mxu0 0
    %328 = vmatpush1.bf16.msra.mxu0 0
    %329 = vmatprep.subr.bf16.mxu0 0
    %330 = vmatpush1.bf16.msra.mxu0 0
    %331 = vmatprep.subr.bf16.mxu0 0
    %332 = vmatpush1.bf16.msra.mxu0 0
    %333 = vmatprep.subr.bf16.mxu0 0
    %334 = vmatpush1.bf16.msra.mxu0 0
    %335 = vmatprep.subr.bf16.mxu0 0
    %336 = vmatpush1.bf16.msra.mxu0 0
    %337 = vmatprep.subr.bf16.mxu0 0
    %338 = vmatpush1.bf16.msra.mxu0 0
    %339 = vmatprep.subr.bf16.mxu0 0
    %340 = vmatpush1.bf16.msra.mxu0 0
    %341 = vmatprep.subr.bf16.mxu0 0
    %342 = vmatpush1.bf16.msra.mxu0 0
    %343 = vmatprep.subr.bf16.mxu0 0
    %344 = vmatpush1.bf16.msra.mxu0 0
    %345 = vmatprep.subr.bf16.mxu0 0
    %346 = vmatpush1.bf16.msra.mxu0 0
    %347 = vmatprep.subr.bf16.mxu0 0
    %348 = vmatpush1.bf16.msra.mxu0 0
    %349 = vmatprep.mubr.bf16.mxu0 0
    %350 = vmatmul.mubr.bf16.gmra.mrb[0].mxu0 %v312
    %v351 = vpop.f32.mrb[0].mxu0
    %v352 = vadd.f32 %v284, %v351
    %v353 = vpop.f32.mrb[0].mxu0
    %v354 = vpop.f32.mrb[0].mxu0
    %v355 = vadd.f32 %v289, %v354
    %v356 = vpop.f32.mrb[0].mxu0
    %357 = vmatprep.mubr.bf16.mxu0 0
    %358 = vmatmul.mubr.bf16.gmra.mrb[0].mxu0 %v315
    %v359 = vpop.f32.mrb[0].mxu0
    %v360 = vadd.f32 %v294, %v359
    %v361 = vpop.f32.mrb[0].mxu0
    %v362 = vpop.f32.mrb[0].mxu0
    %v363 = vadd.f32 %v299, %v362
    %v364 = vpop.f32.mrb[0].mxu0
    %365 = vdwg.mxu0
    %v366 = vmax.f32 %v352, 0.0
    %v367 = vmax.f32 %v355, 0.0
    %v368 = vmax.f32 %v360, 0.0
    %v369 = vmax.f32 %v363, 0.0
    %v370 = vadd.f32 %v167, %v366
    %v371 = vadd.f32 %v168, %v367
    %v372 = vadd.f32 %v169, %v368
    %v373 = vadd.f32 %v170, %v369
    %v374 = vld [vmem:[%s7] sm:$0xf]
    %v375 = vld [vmem:[%s7 + $0x4] sm:$0xf]
    %v376 = vld [vmem:[%s7 + $0x8] sm:$0xf]
    %v377 = vld [vmem:[%s7 + $0xc] sm:$0xf]
    %v378 = vpack.c.bf16 %v371, %v370
    %v379 = vpack.c.bf16 %v373, %v372
    %v380 = vld [vmem:[%s8] sm:$0xff]
    %v381 = vld [vmem:[%s8 + $0x8] sm:$0xff]
    %v382 = vld [vmem:[%s8 + $0x10] sm:$0xff]
    %v383 = vld [vmem:[%s8 + $0x18] sm:$0xff]
    %385 = vset.pattern.permute.xlu0 0
    %386 = vperm.xlu0 %385, %v380
    %v387 = vpop.permute.xlu0 %386
    %390 = vset.pattern.permute.xlu0 0
    %391 = vperm.xlu0 %390, %v381
    %v392 = vpop.permute.xlu0 %391
    %395 = vset.pattern.permute.xlu0 0
    %396 = vperm.xlu0 %395, %v382
    %v397 = vpop.permute.xlu0 %396
    %400 = vset.pattern.permute.xlu0 0
    %401 = vperm.xlu0 %400, %v383
    %v402 = vpop.permute.xlu0 %401
    %v408 = vunpack.c.l.b16 %v374
    %v409 = vunpack.c.l.b16 %v375
    %v410 = vunpack.c.l.b16 %v376
    %v411 = vunpack.c.l.b16 %v377
    %v412 = vpack.c.b16 %v409, %v408
    %v413 = vpack.c.b16 %v411, %v410
    %v415 = vsel %vm211, %v412, 0
    %v418 = vsel %vm211, %v413, 0
    %420 = vmatprep.subr.bf16.mxu0 0
    %421 = vmatpush1.bf16.msra.mxu0 %v378
    %422 = vmatprep.subr.bf16.mxu0 0
    %423 = vmatpush1.bf16.msra.mxu0 %v379
    %424 = vmatprep.subr.bf16.mxu0 0
    %425 = vmatpush1.bf16.msra.mxu0 0
    %426 = vmatprep.subr.bf16.mxu0 0
    %427 = vmatpush1.bf16.msra.mxu0 0
    %428 = vmatprep.subr.bf16.mxu0 0
    %429 = vmatpush1.bf16.msra.mxu0 0
    %430 = vmatprep.subr.bf16.mxu0 0
    %431 = vmatpush1.bf16.msra.mxu0 0
    %432 = vmatprep.subr.bf16.mxu0 0
    %433 = vmatpush1.bf16.msra.mxu0 0
    %434 = vmatprep.subr.bf16.mxu0 0
    %435 = vmatpush1.bf16.msra.mxu0 0
    %436 = vmatprep.subr.bf16.mxu0 0
    %437 = vmatpush1.bf16.msra.mxu0 0
    %438 = vmatprep.subr.bf16.mxu0 0
    %439 = vmatpush1.bf16.msra.mxu0 0
    %440 = vmatprep.subr.bf16.mxu0 0
    %441 = vmatpush1.bf16.msra.mxu0 0
    %442 = vmatprep.subr.bf16.mxu0 0
    %443 = vmatpush1.bf16.msra.mxu0 0
    %444 = vmatprep.subr.bf16.mxu0 0
    %445 = vmatpush1.bf16.msra.mxu0 0
    %446 = vmatprep.subr.bf16.mxu0 0
    %447 = vmatpush1.bf16.msra.mxu0 0
    %448 = vmatprep.subr.bf16.mxu0 0
    %449 = vmatpush1.bf16.msra.mxu0 0
    %450 = vmatprep.subr.bf16.mxu0 0
    %451 = vmatpush1.bf16.msra.mxu0 0
    %452 = vmatprep.mubr.bf16.mxu0 0
    %453 = vmatmul.mubr.bf16.gmra.mrb[0].mxu0 %v415
    %v454 = vpop.f32.mrb[0].mxu0
    %v455 = vadd.f32 %v387, %v454
    %v456 = vpop.f32.mrb[0].mxu0
    %v457 = vpop.f32.mrb[0].mxu0
    %v458 = vadd.f32 %v392, %v457
    %v459 = vpop.f32.mrb[0].mxu0
    %460 = vmatprep.mubr.bf16.mxu0 0
    %461 = vmatmul.mubr.bf16.gmra.mrb[0].mxu0 %v418
    %v462 = vpop.f32.mrb[0].mxu0
    %v463 = vadd.f32 %v397, %v462
    %v464 = vpop.f32.mrb[0].mxu0
    %v465 = vpop.f32.mrb[0].mxu0
    %v466 = vadd.f32 %v402, %v465
    %v467 = vpop.f32.mrb[0].mxu0
    %468 = vdwg.mxu0
    %v469 = vmax.f32 %v455, 0.0
    %v470 = vmax.f32 %v458, 0.0
    %v471 = vmax.f32 %v463, 0.0
    %v472 = vmax.f32 %v466, 0.0
    %v473 = vld [vmem:[%s9] sm:$0xf]
    %v474 = vld [vmem:[%s9 + $0x4] sm:$0xf]
    %v475 = vld [vmem:[%s9 + $0x8] sm:$0xf]
    %v476 = vld [vmem:[%s9 + $0xc] sm:$0xf]
    %v477 = vpack.c.bf16 %v470, %v469
    %v478 = vpack.c.bf16 %v472, %v471
    %v479 = vld [vmem:[%s10] sm:$0xff]
    %v480 = vld [vmem:[%s10 + $0x8] sm:$0xff]
    %v481 = vld [vmem:[%s10 + $0x10] sm:$0xff]
    %v482 = vld [vmem:[%s10 + $0x18] sm:$0xff]
    %484 = vset.pattern.permute.xlu0 0
    %485 = vperm.xlu0 %484, %v479
    %v486 = vpop.permute.xlu0 %485
    %489 = vset.pattern.permute.xlu0 0
    %490 = vperm.xlu0 %489, %v480
    %v491 = vpop.permute.xlu0 %490
    %494 = vset.pattern.permute.xlu0 0
    %495 = vperm.xlu0 %494, %v481
    %v496 = vpop.permute.xlu0 %495
    %499 = vset.pattern.permute.xlu0 0
    %500 = vperm.xlu0 %499, %v482
    %v501 = vpop.permute.xlu0 %500
    %v507 = vunpack.c.l.b16 %v473
    %v508 = vunpack.c.l.b16 %v474
    %v509 = vunpack.c.l.b16 %v475
    %v510 = vunpack.c.l.b16 %v476
    %v511 = vpack.c.b16 %v508, %v507
    %v512 = vpack.c.b16 %v510, %v509
    %v514 = vsel %vm211, %v511, 0
    %v517 = vsel %vm211, %v512, 0
    %519 = vmatprep.subr.bf16.mxu0 0
    %520 = vmatpush1.bf16.msra.mxu0 %v477
    %521 = vmatprep.subr.bf16.mxu0 0
    %522 = vmatpush1.bf16.msra.mxu0 %v478
    %523 = vmatprep.subr.bf16.mxu0 0
    %524 = vmatpush1.bf16.msra.mxu0 0
    %525 = vmatprep.subr.bf16.mxu0 0
    %526 = vmatpush1.bf16.msra.mxu0 0
    %527 = vmatprep.subr.bf16.mxu0 0
    %528 = vmatpush1.bf16.msra.mxu0 0
    %529 = vmatprep.subr.bf16.mxu0 0
    %530 = vmatpush1.bf16.msra.mxu0 0
    %531 = vmatprep.subr.bf16.mxu0 0
    %532 = vmatpush1.bf16.msra.mxu0 0
    %533 = vmatprep.subr.bf16.mxu0 0
    %534 = vmatpush1.bf16.msra.mxu0 0
    %535 = vmatprep.subr.bf16.mxu0 0
    %536 = vmatpush1.bf16.msra.mxu0 0
    %537 = vmatprep.subr.bf16.mxu0 0
    %538 = vmatpush1.bf16.msra.mxu0 0
    %539 = vmatprep.subr.bf16.mxu0 0
    %540 = vmatpush1.bf16.msra.mxu0 0
    %541 = vmatprep.subr.bf16.mxu0 0
    %542 = vmatpush1.bf16.msra.mxu0 0
    %543 = vmatprep.subr.bf16.mxu0 0
    %544 = vmatpush1.bf16.msra.mxu0 0
    %545 = vmatprep.subr.bf16.mxu0 0
    %546 = vmatpush1.bf16.msra.mxu0 0
    %547 = vmatprep.subr.bf16.mxu0 0
    %548 = vmatpush1.bf16.msra.mxu0 0
    %549 = vmatprep.subr.bf16.mxu0 0
    %550 = vmatpush1.bf16.msra.mxu0 0
    %551 = vmatprep.mubr.bf16.mxu0 0
    %552 = vmatmul.mubr.bf16.gmra.mrb[0].mxu0 %v514
    %v553 = vpop.f32.mrb[0].mxu0
    %v554 = vadd.f32 %v486, %v553
    %v555 = vpop.f32.mrb[0].mxu0
    %v556 = vpop.f32.mrb[0].mxu0
    %v557 = vadd.f32 %v491, %v556
    %v558 = vpop.f32.mrb[0].mxu0
    %559 = vmatprep.mubr.bf16.mxu0 0
    %560 = vmatmul.mubr.bf16.gmra.mrb[0].mxu0 %v517
    %v561 = vpop.f32.mrb[0].mxu0
    %v562 = vadd.f32 %v496, %v561
    %v563 = vpop.f32.mrb[0].mxu0
    %v564 = vpop.f32.mrb[0].mxu0
    %v565 = vadd.f32 %v501, %v564
    %v566 = vpop.f32.mrb[0].mxu0
    %567 = vdwg.mxu0
    %v568 = vmax.f32 %v554, 0.0
    %v569 = vmax.f32 %v557, 0.0
    %v570 = vmax.f32 %v562, 0.0
    %v571 = vmax.f32 %v565, 0.0
    %v572 = vadd.f32 %v370, %v568
    %v573 = vadd.f32 %v371, %v569
    %v574 = vadd.f32 %v372, %v570
    %v575 = vadd.f32 %v373, %v571
    %v576 = vld [vmem:[%s11] sm:$0xf]
    %v577 = vld [vmem:[%s11 + $0x4] sm:$0xf]
    %v578 = vld [vmem:[%s11 + $0x8] sm:$0xf]
    %v579 = vld [vmem:[%s11 + $0xc] sm:$0xf]
    %v580 = vpack.c.bf16 %v573, %v572
    %v581 = vpack.c.bf16 %v575, %v574
    %v582 = vld [vmem:[%s12] sm:$0xff]
    %v583 = vld [vmem:[%s12 + $0x8] sm:$0xff]
    %v584 = vld [vmem:[%s12 + $0x10] sm:$0xff]
    %v585 = vld [vmem:[%s12 + $0x18] sm:$0xff]
    %587 = vset.pattern.permute.xlu0 0
    %588 = vperm.xlu0 %587, %v582
    %v589 = vpop.permute.xlu0 %588
    %592 = vset.pattern.permute.xlu0 0
    %593 = vperm.xlu0 %592, %v583
    %v594 = vpop.permute.xlu0 %593
    %597 = vset.pattern.permute.xlu0 0
    %598 = vperm.xlu0 %597, %v584
    %v599 = vpop.permute.xlu0 %598
    %602 = vset.pattern.permute.xlu0 0
    %603 = vperm.xlu0 %602, %v585
    %v604 = vpop.permute.xlu0 %603
    %v610 = vunpack.c.l.b16 %v576
    %v611 = vunpack.c.l.b16 %v577
    %v612 = vunpack.c.l.b16 %v578
    %v613 = vunpack.c.l.b16 %v579
    %v614 = vpack.c.b16 %v611, %v610
    %v615 = vpack.c.b16 %v613, %v612
    %v617 = vsel %vm211, %v614, 0
    %v620 = vsel %vm211, %v615, 0
    %622 = vmatprep.subr.bf16.mxu0 0
    %623 = vmatpush1.bf16.msra.mxu0 %v580
    %624 = vmatprep.subr.bf16.mxu0 0
    %625 = vmatpush1.bf16.msra.mxu0 %v581
    %626 = vmatprep.subr.bf16.mxu0 0
    %627 = vmatpush1.bf16.msra.mxu0 0
    %628 = vmatprep.subr.bf16.mxu0 0
    %629 = vmatpush1.bf16.msra.mxu0 0
    %630 = vmatprep.subr.bf16.mxu0 0
    %631 = vmatpush1.bf16.msra.mxu0 0
    %632 = vmatprep.subr.bf16.mxu0 0
    %633 = vmatpush1.bf16.msra.mxu0 0
    %634 = vmatprep.subr.bf16.mxu0 0
    %635 = vmatpush1.bf16.msra.mxu0 0
    %636 = vmatprep.subr.bf16.mxu0 0
    %637 = vmatpush1.bf16.msra.mxu0 0
    %638 = vmatprep.subr.bf16.mxu0 0
    %639 = vmatpush1.bf16.msra.mxu0 0
    %640 = vmatprep.subr.bf16.mxu0 0
    %641 = vmatpush1.bf16.msra.mxu0 0
    %642 = vmatprep.subr.bf16.mxu0 0
    %643 = vmatpush1.bf16.msra.mxu0 0
    %644 = vmatprep.subr.bf16.mxu0 0
    %645 = vmatpush1.bf16.msra.mxu0 0
    %646 = vmatprep.subr.bf16.mxu0 0
    %647 = vmatpush1.bf16.msra.mxu0 0
    %648 = vmatprep.subr.bf16.mxu0 0
    %649 = vmatpush1.bf16.msra.mxu0 0
    %650 = vmatprep.subr.bf16.mxu0 0
    %651 = vmatpush1.bf16.msra.mxu0 0
    %652 = vmatprep.subr.bf16.mxu0 0
    %653 = vmatpush1.bf16.msra.mxu0 0
    %654 = vmatprep.mubr.bf16.mxu0 0
    %655 = vmatmul.mubr.bf16.gmra.mrb[0].mxu0 %v617
    %v656 = vpop.f32.mrb[0].mxu0
    %v657 = vadd.f32 %v589, %v656
    %v658 = vpop.f32.mrb[0].mxu0
    %v659 = vpop.f32.mrb[0].mxu0
    %v660 = vadd.f32 %v594, %v659
    %v661 = vpop.f32.mrb[0].mxu0
    %662 = vmatprep.mubr.bf16.mxu0 0
    %663 = vmatmul.mubr.bf16.gmra.mrb[0].mxu0 %v620
    %v664 = vpop.f32.mrb[0].mxu0
    %v665 = vadd.f32 %v599, %v664
    %v666 = vpop.f32.mrb[0].mxu0
    %v667 = vpop.f32.mrb[0].mxu0
    %v668 = vadd.f32 %v604, %v667
    %v669 = vpop.f32.mrb[0].mxu0
    %670 = vdwg.mxu0
    %v671 = vmax.f32 %v657, 0.0
    %v672 = vmax.f32 %v660, 0.0
    %v673 = vmax.f32 %v665, 0.0
    %v674 = vmax.f32 %v668, 0.0
    %v675 = vld [vmem:[%s13] sm:$0xf]
    %v676 = vld [vmem:[%s13 + $0x4] sm:$0xf]
    %v677 = vld [vmem:[%s13 + $0x8] sm:$0xf]
    %v678 = vld [vmem:[%s13 + $0xc] sm:$0xf]
    %v679 = vpack.c.bf16 %v672, %v671
    %v680 = vpack.c.bf16 %v674, %v673
    %v681 = vld [vmem:[%s14] sm:$0xff]
    %v682 = vld [vmem:[%s14 + $0x8] sm:$0xff]
    %v683 = vld [vmem:[%s14 + $0x10] sm:$0xff]
    %v684 = vld [vmem:[%s14 + $0x18] sm:$0xff]
    %686 = vset.pattern.permute.xlu0 0
    %687 = vperm.xlu0 %686, %v681
    %v688 = vpop.permute.xlu0 %687
    %691 = vset.pattern.permute.xlu0 0
    %692 = vperm.xlu0 %691, %v682
    %v693 = vpop.permute.xlu0 %692
    %696 = vset.pattern.permute.xlu0 0
    %697 = vperm.xlu0 %696, %v683
    %v698 = vpop.permute.xlu0 %697
    %701 = vset.pattern.permute.xlu0 0
    %702 = vperm.xlu0 %701, %v684
    %v703 = vpop.permute.xlu0 %702
    %v709 = vunpack.c.l.b16 %v675
    %v710 = vunpack.c.l.b16 %v676
    %v711 = vunpack.c.l.b16 %v677
    %v712 = vunpack.c.l.b16 %v678
    %v713 = vpack.c.b16 %v710, %v709
    %v714 = vpack.c.b16 %v712, %v711
    %v716 = vsel %vm211, %v713, 0
    %v719 = vsel %vm211, %v714, 0
    %721 = vmatprep.subr.bf16.mxu0 0
    %722 = vmatpush1.bf16.msra.mxu0 %v679
    %723 = vmatprep.subr.bf16.mxu0 0
    %724 = vmatpush1.bf16.msra.mxu0 %v680
    %725 = vmatprep.subr.bf16.mxu0 0
    %726 = vmatpush1.bf16.msra.mxu0 0
    %727 = vmatprep.subr.bf16.mxu0 0
    %728 = vmatpush1.bf16.msra.mxu0 0
    %729 = vmatprep.subr.bf16.mxu0 0
    %730 = vmatpush1.bf16.msra.mxu0 0
    %731 = vmatprep.subr.bf16.mxu0 0
    %732 = vmatpush1.bf16.msra.mxu0 0
    %733 = vmatprep.subr.bf16.mxu0 0
    %734 = vmatpush1.bf16.msra.mxu0 0
    %735 = vmatprep.subr.bf16.mxu0 0
    %736 = vmatpush1.bf16.msra.mxu0 0
    %737 = vmatprep.subr.bf16.mxu0 0
    %738 = vmatpush1.bf16.msra.mxu0 0
    %739 = vmatprep.subr.bf16.mxu0 0
    %740 = vmatpush1.bf16.msra.mxu0 0
    %741 = vmatprep.subr.bf16.mxu0 0
    %742 = vmatpush1.bf16.msra.mxu0 0
    %743 = vmatprep.subr.bf16.mxu0 0
    %744 = vmatpush1.bf16.msra.mxu0 0
    %745 = vmatprep.subr.bf16.mxu0 0
    %746 = vmatpush1.bf16.msra.mxu0 0
    %747 = vmatprep.subr.bf16.mxu0 0
    %748 = vmatpush1.bf16.msra.mxu0 0
    %749 = vmatprep.subr.bf16.mxu0 0
    %750 = vmatpush1.bf16.msra.mxu0 0
    %751 = vmatprep.subr.bf16.mxu0 0
    %752 = vmatpush1.bf16.msra.mxu0 0
    %753 = vmatprep.mubr.bf16.mxu0 0
    %754 = vmatmul.mubr.bf16.gmra.mrb[0].mxu0 %v716
    %v755 = vpop.f32.mrb[0].mxu0
    %v756 = vadd.f32 %v688, %v755
    %v757 = vpop.f32.mrb[0].mxu0
    %v758 = vpop.f32.mrb[0].mxu0
    %v759 = vadd.f32 %v693, %v758
    %v760 = vpop.f32.mrb[0].mxu0
    %761 = vmatprep.mubr.bf16.mxu0 0
    %762 = vmatmul.mubr.bf16.gmra.mrb[0].mxu0 %v719
    %v763 = vpop.f32.mrb[0].mxu0
    %v764 = vadd.f32 %v698, %v763
    %v765 = vpop.f32.mrb[0].mxu0
    %v766 = vpop.f32.mrb[0].mxu0
    %v767 = vadd.f32 %v703, %v766
    %v768 = vpop.f32.mrb[0].mxu0
    %769 = vdwg.mxu0
    %v770 = vmax.f32 %v756, 0.0
    %v771 = vmax.f32 %v759, 0.0
    %v772 = vmax.f32 %v764, 0.0
    %v773 = vmax.f32 %v767, 0.0
    %v774 = vadd.f32 %v572, %v770
    %v775 = vadd.f32 %v573, %v771
    %v776 = vadd.f32 %v574, %v772
    %v777 = vadd.f32 %v575, %v773
    %v778 = vld [vmem:[%s15] sm:$0xf]
    %v779 = vld [vmem:[%s15 + $0x4] sm:$0xf]
    %v780 = vld [vmem:[%s15 + $0x8] sm:$0xf]
    %v781 = vld [vmem:[%s15 + $0xc] sm:$0xf]
    %v782 = vpack.c.bf16 %v775, %v774
    %v783 = vpack.c.bf16 %v777, %v776
    %v784 = vld [vmem:[%s16] sm:$0xff]
    %v785 = vld [vmem:[%s16 + $0x8] sm:$0xff]
    %v786 = vld [vmem:[%s16 + $0x10] sm:$0xff]
    %v787 = vld [vmem:[%s16 + $0x18] sm:$0xff]
    %789 = vset.pattern.permute.xlu0 0
    %790 = vperm.xlu0 %789, %v784
    %v791 = vpop.permute.xlu0 %790
    %794 = vset.pattern.permute.xlu0 0
    %795 = vperm.xlu0 %794, %v785
    %v796 = vpop.permute.xlu0 %795
    %799 = vset.pattern.permute.xlu0 0
    %800 = vperm.xlu0 %799, %v786
    %v801 = vpop.permute.xlu0 %800
    %804 = vset.pattern.permute.xlu0 0
    %805 = vperm.xlu0 %804, %v787
    %v806 = vpop.permute.xlu0 %805
    %v812 = vunpack.c.l.b16 %v778
    %v813 = vunpack.c.l.b16 %v779
    %v814 = vunpack.c.l.b16 %v780
    %v815 = vunpack.c.l.b16 %v781
    %v816 = vpack.c.b16 %v813, %v812
    %v817 = vpack.c.b16 %v815, %v814
    %v819 = vsel %vm211, %v816, 0
    %v822 = vsel %vm211, %v817, 0
    %824 = vmatprep.subr.bf16.mxu0 0
    %825 = vmatpush1.bf16.msra.mxu0 %v782
    %826 = vmatprep.subr.bf16.mxu0 0
    %827 = vmatpush1.bf16.msra.mxu0 %v783
    %828 = vmatprep.subr.bf16.mxu0 0
    %829 = vmatpush1.bf16.msra.mxu0 0
    %830 = vmatprep.subr.bf16.mxu0 0
    %831 = vmatpush1.bf16.msra.mxu0 0
    %832 = vmatprep.subr.bf16.mxu0 0
    %833 = vmatpush1.bf16.msra.mxu0 0
    %834 = vmatprep.subr.bf16.mxu0 0
    %835 = vmatpush1.bf16.msra.mxu0 0
    %836 = vmatprep.subr.bf16.mxu0 0
    %837 = vmatpush1.bf16.msra.mxu0 0
    %838 = vmatprep.subr.bf16.mxu0 0
    %839 = vmatpush1.bf16.msra.mxu0 0
    %840 = vmatprep.subr.bf16.mxu0 0
    %841 = vmatpush1.bf16.msra.mxu0 0
    %842 = vmatprep.subr.bf16.mxu0 0
    %843 = vmatpush1.bf16.msra.mxu0 0
    %844 = vmatprep.subr.bf16.mxu0 0
    %845 = vmatpush1.bf16.msra.mxu0 0
    %846 = vmatprep.subr.bf16.mxu0 0
    %847 = vmatpush1.bf16.msra.mxu0 0
    %848 = vmatprep.subr.bf16.mxu0 0
    %849 = vmatpush1.bf16.msra.mxu0 0
    %850 = vmatprep.subr.bf16.mxu0 0
    %851 = vmatpush1.bf16.msra.mxu0 0
    %852 = vmatprep.subr.bf16.mxu0 0
    %853 = vmatpush1.bf16.msra.mxu0 0
    %854 = vmatprep.subr.bf16.mxu0 0
    %855 = vmatpush1.bf16.msra.mxu0 0
    %856 = vmatprep.mubr.bf16.mxu0 0
    %857 = vmatmul.mubr.bf16.gmra.mrb[0].mxu0 %v819
    %v858 = vpop.f32.mrb[0].mxu0
    %v859 = vadd.f32 %v791, %v858
    %v860 = vpop.f32.mrb[0].mxu0
    %v861 = vpop.f32.mrb[0].mxu0
    %v862 = vadd.f32 %v796, %v861
    %v863 = vpop.f32.mrb[0].mxu0
    %864 = vmatprep.mubr.bf16.mxu0 0
    %865 = vmatmul.mubr.bf16.gmra.mrb[0].mxu0 %v822
    %v866 = vpop.f32.mrb[0].mxu0
    %v867 = vadd.f32 %v801, %v866
    %v868 = vpop.f32.mrb[0].mxu0
    %v869 = vpop.f32.mrb[0].mxu0
    %v870 = vadd.f32 %v806, %v869
    %v871 = vpop.f32.mrb[0].mxu0
    %872 = vdwg.mxu0
    %v873 = vmax.f32 %v859, 0.0
    %v874 = vmax.f32 %v862, 0.0
    %v875 = vmax.f32 %v867, 0.0
    %v876 = vmax.f32 %v870, 0.0
    %v877 = vld [vmem:[%s17] sm:$0xf]
    %v878 = vld [vmem:[%s17 + $0x4] sm:$0xf]
    %v879 = vld [vmem:[%s17 + $0x8] sm:$0xf]
    %v880 = vld [vmem:[%s17 + $0xc] sm:$0xf]
    %v881 = vpack.c.bf16 %v874, %v873
    %v882 = vpack.c.bf16 %v876, %v875
    %v883 = vld [vmem:[%s18] sm:$0xff]
    %v884 = vld [vmem:[%s18 + $0x8] sm:$0xff]
    %v885 = vld [vmem:[%s18 + $0x10] sm:$0xff]
    %v886 = vld [vmem:[%s18 + $0x18] sm:$0xff]
    %888 = vset.pattern.permute.xlu0 0
    %889 = vperm.xlu0 %888, %v883
    %v890 = vpop.permute.xlu0 %889
    %893 = vset.pattern.permute.xlu0 0
    %894 = vperm.xlu0 %893, %v884
    %v895 = vpop.permute.xlu0 %894
    %898 = vset.pattern.permute.xlu0 0
    %899 = vperm.xlu0 %898, %v885
    %v900 = vpop.permute.xlu0 %899
    %903 = vset.pattern.permute.xlu0 0
    %904 = vperm.xlu0 %903, %v886
    %v905 = vpop.permute.xlu0 %904
    %v911 = vunpack.c.l.b16 %v877
    %v912 = vunpack.c.l.b16 %v878
    %v913 = vunpack.c.l.b16 %v879
    %v914 = vunpack.c.l.b16 %v880
    %v915 = vpack.c.b16 %v912, %v911
    %v916 = vpack.c.b16 %v914, %v913
    %v918 = vsel %vm211, %v915, 0
    %v921 = vsel %vm211, %v916, 0
    %923 = vmatprep.subr.bf16.mxu0 0
    %924 = vmatpush1.bf16.msra.mxu0 %v881
    %925 = vmatprep.subr.bf16.mxu0 0
    %926 = vmatpush1.bf16.msra.mxu0 %v882
    %927 = vmatprep.subr.bf16.mxu0 0
    %928 = vmatpush1.bf16.msra.mxu0 0
    %929 = vmatprep.subr.bf16.mxu0 0
    %930 = vmatpush1.bf16.msra.mxu0 0
    %931 = vmatprep.subr.bf16.mxu0 0
    %932 = vmatpush1.bf16.msra.mxu0 0
    %933 = vmatprep.subr.bf16.mxu0 0
    %934 = vmatpush1.bf16.msra.mxu0 0
    %935 = vmatprep.subr.bf16.mxu0 0
    %936 = vmatpush1.bf16.msra.mxu0 0
    %937 = vmatprep.subr.bf16.mxu0 0
    %938 = vmatpush1.bf16.msra.mxu0 0
    %939 = vmatprep.subr.bf16.mxu0 0
    %940 = vmatpush1.bf16.msra.mxu0 0
    %941 = vmatprep.subr.bf16.mxu0 0
    %942 = vmatpush1.bf16.msra.mxu0 0
    %943 = vmatprep.subr.bf16.mxu0 0
    %944 = vmatpush1.bf16.msra.mxu0 0
    %945 = vmatprep.subr.bf16.mxu0 0
    %946 = vmatpush1.bf16.msra.mxu0 0
    %947 = vmatprep.subr.bf16.mxu0 0
    %948 = vmatpush1.bf16.msra.mxu0 0
    %949 = vmatprep.subr.bf16.mxu0 0
    %950 = vmatpush1.bf16.msra.mxu0 0
    %951 = vmatprep.subr.bf16.mxu0 0
    %952 = vmatpush1.bf16.msra.mxu0 0
    %953 = vmatprep.subr.bf16.mxu0 0
    %954 = vmatpush1.bf16.msra.mxu0 0
    %955 = vmatprep.mubr.bf16.mxu0 0
    %956 = vmatmul.mubr.bf16.gmra.mrb[0].mxu0 %v918
    %v957 = vpop.f32.mrb[0].mxu0
    %v958 = vadd.f32 %v890, %v957
    %v959 = vpop.f32.mrb[0].mxu0
    %v960 = vpop.f32.mrb[0].mxu0
    %v961 = vadd.f32 %v895, %v960
    %v962 = vpop.f32.mrb[0].mxu0
    %963 = vmatprep.mubr.bf16.mxu0 0
    %964 = vmatmul.mubr.bf16.gmra.mrb[0].mxu0 %v921
    %v965 = vpop.f32.mrb[0].mxu0
    %v966 = vadd.f32 %v900, %v965
    %v967 = vpop.f32.mrb[0].mxu0
    %v968 = vpop.f32.mrb[0].mxu0
    %v969 = vadd.f32 %v905, %v968
    %v970 = vpop.f32.mrb[0].mxu0
    %971 = vdwg.mxu0
    %v972 = vmax.f32 %v958, 0.0
    %v973 = vmax.f32 %v961, 0.0
    %v974 = vmax.f32 %v966, 0.0
    %v975 = vmax.f32 %v969, 0.0
    %v976 = vadd.f32 %v774, %v972
    %v977 = vadd.f32 %v775, %v973
    %v978 = vadd.f32 %v776, %v974
    %v979 = vadd.f32 %v777, %v975
    %v980 = vld [vmem:[%s19] sm:$0xf]
    %v981 = vld [vmem:[%s19 + $0x4] sm:$0xf]
    %v982 = vpack.c.bf16 %v977, %v976
    %v983 = vpack.c.bf16 %v979, %v978
    %v986 = vunpack.c.l.b16 %v980
    %v987 = vunpack.c.l.b16 %v981
    %v988 = vpack.c.b16 %v987, %v986
    %v990 = vsel %vm211, %v988, 0
    %992 = vmatprep.subr.bf16.mxu0 0
    %993 = vmatpush1.bf16.msra.mxu0 %v982
    %994 = vmatprep.subr.bf16.mxu0 0
    %995 = vmatpush1.bf16.msra.mxu0 %v983
    %996 = vmatprep.subr.bf16.mxu0 0
    %997 = vmatpush1.bf16.msra.mxu0 0
    %998 = vmatprep.subr.bf16.mxu0 0
    %999 = vmatpush1.bf16.msra.mxu0 0
    %1000 = vmatprep.subr.bf16.mxu0 0
    %1001 = vmatpush1.bf16.msra.mxu0 0
    %1002 = vmatprep.subr.bf16.mxu0 0
    %1003 = vmatpush1.bf16.msra.mxu0 0
    %1004 = vmatprep.subr.bf16.mxu0 0
    %1005 = vmatpush1.bf16.msra.mxu0 0
    %1006 = vmatprep.subr.bf16.mxu0 0
    %1007 = vmatpush1.bf16.msra.mxu0 0
    %1008 = vmatprep.subr.bf16.mxu0 0
    %1009 = vmatpush1.bf16.msra.mxu0 0
    %1010 = vmatprep.subr.bf16.mxu0 0
    %1011 = vmatpush1.bf16.msra.mxu0 0
    %1012 = vmatprep.subr.bf16.mxu0 0
    %1013 = vmatpush1.bf16.msra.mxu0 0
    %1014 = vmatprep.subr.bf16.mxu0 0
    %1015 = vmatpush1.bf16.msra.mxu0 0
    %1016 = vmatprep.subr.bf16.mxu0 0
    %1017 = vmatpush1.bf16.msra.mxu0 0
    %1018 = vmatprep.subr.bf16.mxu0 0
    %1019 = vmatpush1.bf16.msra.mxu0 0
    %1020 = vmatprep.subr.bf16.mxu0 0
    %1021 = vmatpush1.bf16.msra.mxu0 0
    %1022 = vmatprep.subr.bf16.mxu0 0
    %1023 = vmatpush1.bf16.msra.mxu0 0
    %1024 = vmatprep.mubr.bf16.mxu0 0
    %1025 = vmatmul.mubr.bf16.gmra.mrb[0].mxu0 %v990
    %v1026 = vpop.f32.mrb[0].mxu0
    %v1027 = vadd.f32 0.0, %v1026
    %v1028 = vpop.f32.mrb[0].mxu0
    %v1029 = vpop.f32.mrb[0].mxu0
    %v1030 = vadd.f32 0.0, %v1029
    %v1031 = vpop.f32.mrb[0].mxu0
    %1032 = vdwg.mxu0
    %1033 = vst [vmem:[#allocation2] sm:$0xff] %v1027
    %1034 = vst [vmem:[#allocation2 + $0x8] sm:$0xff] %v1030
    // Predicated region
    $region82: #{tpu_custom_call.1} parent=1 // pred_check
      _
    $region83: #{tpu_custom_call.1} parent=1 // pred_check_branch
      %1036 = sbr.rel (0) target = $region85
    $region84: #{tpu_custom_call.1} parent=1 // pred_region
      %s1038 = ssub.s32 256, 256
      %1039 = vsyncadd [#allocation3], %s1038
      %s1040 = sshll.u32 [#allocation2], 4
      %s1041 = int_to_ptr.vmem [resolvable:$true] %s1040
      %1046 = dma.vmem_to_hbm [thread:$0]  %s1041, 256, %s20, [#allocation3], 128, 128, 8
    $region85: #{tpu_custom_call.1} parent=1 // pred_fallthru
      _
    // Predicated region
    $region86: #{tpu_custom_call.1} parent=1 // pred_check
      _
    $region87: #{tpu_custom_call.1} parent=1 // pred_check_branch
      %1048 = sbr.rel (0) target = $region89
    $region88: #{tpu_custom_call.1} parent=1 // pred_region
      %1049 = dma.done [#allocation3], 256
    $region89: #{tpu_custom_call.1} parent=1 // pred_fallthru
      _
    %1050 = vsyncpa [#allocation3], 1

</llo_original>
